<compile_context>
chip_gen: v7x
topology: tpu7x:2x2x1
jax: 0.10.0
libtpu: 0.0.40
codegen_flags: <defaults>
</compile_context>

<pallas_src>
import functools

import numpy as np
import jax
import jax.numpy as jnp
from jax.experimental import pallas as pl
from jax.experimental.pallas import tpu as pltpu


def basic_block_kernel(x_ref, ss_ref, w_ref, mask_ref, o_ref, patches_ref,
                       *, H, W, N, Cin, Cin_pad, Cout):
    # x_ref:       (N, Cin_pad, H*W)    whole batch, channels zero-padded to Cin_pad
    # ss_ref:      (2, Cin_pad, 1)      folded BN scale (row 0) / shift (row 1)
    # w_ref:       (Cout, 9*Cin_pad)    conv weight pre-reshaped/padded for the im2col matmul
    # mask_ref:    (16, N*H*W)          rows 0..8 = per-tap 0/1 border masks (tiled per image)
    # o_ref:       (N, Cin+Cout, H*W)   fused concat output
    # patches_ref: (9*Cin_pad, N*H*W)   VMEM scratch holding the im2col matrix
    HW = H * W
    L = N * HW

    # BN (inference, folded) + ReLU on the whole lane-batched activation.
    x_imgs = [x_ref[n] for n in range(N)]                       # each (Cin_pad, HW)
    x_all = jnp.concatenate(x_imgs, axis=1)                     # (Cin_pad, N*HW)
    a_all = jnp.maximum(x_all * ss_ref[0] + ss_ref[1], 0.0)

    # im2col: 9 XLU-rolled, mask-multiplied copies, each written to an 8-sublane-aligned
    # slice of the VMEM scratch. Cross-image contamination from rolling the concatenated
    # batch lands exactly on positions the border masks zero out.
    t = 0
    for oy in (-1, 0, 1):
        for ox in (-1, 0, 1):
            s = oy * W + ox
            tap = a_all if s == 0 else pltpu.roll(a_all, (-s) % L, axis=1)
            if (oy, ox) != (0, 0):
                tap = tap * mask_ref[pl.ds(t, 1), :]            # one vmul per boundary tap
            patches_ref[pl.ds(t * Cin_pad, Cin_pad), :] = tap
            t += 1

    # Single MXU matmul over the whole batch with f32 accumulation:
    # (Cout, 9*Cin_pad) @ (9*Cin_pad, N*HW) -> (Cout, N*HW).
    conv = jnp.dot(w_ref[...], patches_ref[...], preferred_element_type=jnp.float32)

    # Fused torch.cat((x, out), dim=1): one aligned (Cin+Cout, HW) slab store per image.
    for n in range(N):
        o_ref[n] = jnp.concatenate(
            [x_imgs[n][:Cin, :], conv[:, n * HW:(n + 1) * HW]], axis=0
        ).astype(o_ref.dtype)


def _tap_border_masks(H, W, N):
    """Host-side 0/1 masks for the 9 conv taps, tiled across the lane-batched images.

    Row t = (oy+1)*3 + (ox+1); rows 9..15 are zero padding so the operand is 8-sublane aligned.
    """
    hw = H * W
    y = np.arange(hw) // W
    x = np.arange(hw) % W
    rows = np.zeros((16, N * hw), dtype=np.float32)
    t = 0
    for oy in (-1, 0, 1):
        for ox in (-1, 0, 1):
            ok = (y + oy >= 0) & (y + oy < H) & (x + ox >= 0) & (x + ox < W)
            rows[t] = np.tile(ok.astype(np.float32), N)
            t += 1
    return jnp.asarray(rows)


def basic_block_forward(x_nchw, params, eps=1e-5):
    """BasicBlock.forward (eval-mode BN). x_nchw: (N, Cin, H, W) f32 -> (N, Cin+growth, H, W)."""
    gamma, beta, run_mean, run_var, w_oihw = params
    N, Cin, H, W = x_nchw.shape
    Cout = w_oihw.shape[0]
    HW = H * W
    Cin_pad = ((Cin + 7) // 8) * 8

    # Fold BN (eval mode) into per-channel scale/shift; zero-pad channels to Cin_pad
    # (padded channels have zero activation AND zero weight, so they contribute nothing).
    scale = gamma / jnp.sqrt(run_var + eps)
    shift = beta - run_mean * scale
    ss = jnp.stack([scale, shift], axis=0)                               # (2, Cin)
    ss = jnp.pad(ss, ((0, 0), (0, Cin_pad - Cin))).reshape(2, Cin_pad, 1)

    # Flatten spatial dims (layout-preserving) and zero-pad channels.
    x3 = jnp.pad(x_nchw.reshape(N, Cin, HW), ((0, 0), (0, Cin_pad - Cin), (0, 0)))

    # Weight reshaped for the im2col matmul: column index = (ky*3 + kx) * Cin_pad + ci.
    w2 = jnp.transpose(w_oihw, (0, 2, 3, 1))                             # (Cout, 3, 3, Cin)
    w2 = jnp.pad(w2, ((0, 0), (0, 0), (0, 0), (0, Cin_pad - Cin)))
    w2 = w2.reshape(Cout, 9 * Cin_pad)

    masks = _tap_border_masks(H, W, N)                                   # (16, N*HW)

    kernel = functools.partial(basic_block_kernel, H=H, W=W, N=N,
                               Cin=Cin, Cin_pad=Cin_pad, Cout=Cout)
    out3 = pl.pallas_call(
        kernel,
        out_shape=jax.ShapeDtypeStruct((N, Cin + Cout, HW), x_nchw.dtype),
        grid_spec=pltpu.PrefetchScalarGridSpec(
            num_scalar_prefetch=0,
            grid=(1,),                                    # one step: whole batch at once
            in_specs=[
                pl.BlockSpec((N, Cin_pad, HW), lambda i: (0, 0, 0)),
                pl.BlockSpec((2, Cin_pad, 1), lambda i: (0, 0, 0)),
                pl.BlockSpec((Cout, 9 * Cin_pad), lambda i: (0, 0)),
                pl.BlockSpec((16, N * HW), lambda i: (0, 0)),
            ],
            out_specs=pl.BlockSpec((N, Cin + Cout, HW), lambda i: (0, 0, 0)),
            scratch_shapes=[pltpu.VMEM((9 * Cin_pad, N * HW), jnp.float32)],
        ),
        compiler_params=pltpu.CompilerParams(dimension_semantics=("arbitrary",)),
    )(x3, ss, w2, masks)

    # TODO(synk): F.dropout for drop_rate > 0 (module default drop_rate=0, so it is a no-op here).
    return out3.reshape(N, Cin + Cout, H, W)


def reference_forward(x_nchw, params, eps=1e-5):
    """Plain-JAX reference (eval-mode BN) for correctness checking."""
    gamma, beta, run_mean, run_var, w_oihw = params
    scale = (gamma / jnp.sqrt(run_var + eps)).reshape(1, -1, 1, 1)
    shift = (beta - run_mean * gamma / jnp.sqrt(run_var + eps)).reshape(1, -1, 1, 1)
    a = jnp.maximum(x_nchw * scale + shift, 0.0)
    conv = jax.lax.conv_general_dilated(
        a, w_oihw, window_strides=(1, 1), padding=((1, 1), (1, 1)),
        dimension_numbers=("NCHW", "OIHW", "NCHW"))
    return jnp.concatenate([x_nchw, conv], axis=1)


if __name__ == "__main__":
    # Small shapes consistent with the module: batch=2, in_channels=4, 16x16, growth_rate=12.
    N, Cin, H, W = 2, 4, 16, 16
    growth_rate = 12

    key = jax.random.PRNGKey(0)
    k_x, k_g, k_b, k_m, k_v, k_w = jax.random.split(key, 6)

    x = jax.random.normal(k_x, (N, Cin, H, W), dtype=jnp.float32)

    # Deterministic synthetic parameters (BatchNorm2d(in_channels) + conv3x3(in_channels, growth_rate)).
    gamma = jax.random.uniform(k_g, (Cin,), minval=0.5, maxval=1.5, dtype=jnp.float32)
    beta = 0.1 * jax.random.normal(k_b, (Cin,), dtype=jnp.float32)
    run_mean = 0.1 * jax.random.normal(k_m, (Cin,), dtype=jnp.float32)
    run_var = jax.random.uniform(k_v, (Cin,), minval=0.5, maxval=1.5, dtype=jnp.float32)
    fan_in = Cin * 3 * 3
    w = jax.random.normal(k_w, (growth_rate, Cin, 3, 3), dtype=jnp.float32) * (1.0 / jnp.sqrt(fan_in))

    params = (gamma, beta, run_mean, run_var, w)

    out = jax.block_until_ready(basic_block_forward(x, params))
    ref = jax.block_until_ready(reference_forward(x, params))

    assert out.shape == (N, Cin + growth_rate, H, W), out.shape
    assert jnp.allclose(out, ref, atol=1e-4, rtol=1e-4), float(jnp.max(jnp.abs(out - ref)))

    print("KERNEL_OK")
</pallas_src>

<mosaic_0001>
module attributes {stable_mosaic.version = 11 : i64} {
  func.func @basic_block_kernel(%arg0: i32, %arg1: memref<2x8x256xf32, #tpu.memory_space<vmem>>, %arg2: memref<2x8x1xf32, #tpu.memory_space<vmem>>, %arg3: memref<12x72xf32, #tpu.memory_space<vmem>>, %arg4: memref<16x512xf32, #tpu.memory_space<vmem>>, %arg5: memref<2x16x256xf32, #tpu.memory_space<vmem>>, %arg6: memref<72x512xf32, #tpu.memory_space<vmem>>) attributes {dimension_semantics = [#tpu.dimension_semantics<arbitrary>], iteration_bounds = array<i64: 1>, scalar_prefetch = 0 : i64, scratch_operands = 1 : i64, tpu.core_type = #tpu.core_type<tc>, window_params = [{pipeline_mode = #tpu.pipeline_mode<synchronous>, transform_indices = @transform_0, window_bounds = array<i64: 2, 8, 256>}, {pipeline_mode = #tpu.pipeline_mode<synchronous>, transform_indices = @transform_1, window_bounds = array<i64: 2, 8, 1>}, {pipeline_mode = #tpu.pipeline_mode<synchronous>, transform_indices = @transform_2, window_bounds = array<i64: 12, 72>}, {pipeline_mode = #tpu.pipeline_mode<synchronous>, transform_indices = @transform_3, window_bounds = array<i64: 16, 512>}, {pipeline_mode = #tpu.pipeline_mode<synchronous>, transform_indices = @transform_4, window_bounds = array<i64: 2, 16, 256>}]} {
    %c0 = arith.constant 0 : index
    %c0_0 = arith.constant 0 : index
    %c0_1 = arith.constant 0 : index
    %0 = vector.load %arg1[%c0, %c0_0, %c0_1] : memref<2x8x256xf32, #tpu.memory_space<vmem>>, vector<1x8x256xf32>
    %1 = vector.shape_cast %0 : vector<1x8x256xf32> to vector<8x256xf32>
    %c1 = arith.constant 1 : index
    %c0_2 = arith.constant 0 : index
    %c0_3 = arith.constant 0 : index
    %2 = vector.load %arg1[%c1, %c0_2, %c0_3] : memref<2x8x256xf32, #tpu.memory_space<vmem>>, vector<1x8x256xf32>
    %3 = vector.shape_cast %2 : vector<1x8x256xf32> to vector<8x256xf32>
    %4 = tpu.concatenate %1, %3 in 1 : vector<8x256xf32>, vector<8x256xf32> -> vector<8x512xf32>
    %c0_4 = arith.constant 0 : index
    %c0_5 = arith.constant 0 : index
    %c0_6 = arith.constant 0 : index
    %5 = vector.load %arg2[%c0_4, %c0_5, %c0_6] : memref<2x8x1xf32, #tpu.memory_space<vmem>>, vector<1x8x1xf32>
    %6 = vector.shape_cast %5 : vector<1x8x1xf32> to vector<8x1xf32>
    %7 = vector.broadcast %6 : vector<8x1xf32> to vector<8x512xf32>
    %8 = arith.mulf %4, %7 : vector<8x512xf32>
    %c1_7 = arith.constant 1 : index
    %c0_8 = arith.constant 0 : index
    %c0_9 = arith.constant 0 : index
    %9 = vector.load %arg2[%c1_7, %c0_8, %c0_9] : memref<2x8x1xf32, #tpu.memory_space<vmem>>, vector<1x8x1xf32>
    %10 = vector.shape_cast %9 : vector<1x8x1xf32> to vector<8x1xf32>
    %11 = vector.broadcast %10 : vector<8x1xf32> to vector<8x512xf32>
    %12 = arith.addf %8, %11 : vector<8x512xf32>
    %cst = arith.constant 0.000000e+00 : f32
    %13 = vector.broadcast %cst : f32 to vector<8x512xf32>
    %14 = arith.maximumf %12, %13 : vector<8x512xf32>
    %c17_i32 = arith.constant 17 : i32
    %15 = tpu.dynamic_rotate %14 by %c17_i32 dim 1 : vector<8x512xf32>, i32 -> vector<8x512xf32>
    %c0_10 = arith.constant 0 : index
    %c0_11 = arith.constant 0 : index
    %16 = vector.load %arg4[%c0_10, %c0_11] : memref<16x512xf32, #tpu.memory_space<vmem>>, vector<1x512xf32>
    %17 = vector.broadcast %16 : vector<1x512xf32> to vector<8x512xf32>
    %18 = arith.mulf %15, %17 : vector<8x512xf32>
    %c0_12 = arith.constant 0 : index
    %c0_13 = arith.constant 0 : index
    %19 = vector.load %arg6[%c0_12, %c0_13] : memref<72x512xf32, #tpu.memory_space<vmem>>, vector<8x512xf32>
    tpu.vector_store %arg6[%c0_12, %c0_13], %18 {strides = array<i32>} : memref<72x512xf32, #tpu.memory_space<vmem>>, vector<8x512xf32>,
    %c16_i32 = arith.constant 16 : i32
    %20 = tpu.dynamic_rotate %14 by %c16_i32 dim 1 : vector<8x512xf32>, i32 -> vector<8x512xf32>
    %c1_14 = arith.constant 1 : index
    %c0_15 = arith.constant 0 : index
    %21 = vector.load %arg4[%c1_14, %c0_15] : memref<16x512xf32, #tpu.memory_space<vmem>>, vector<1x512xf32>
    %22 = vector.broadcast %21 : vector<1x512xf32> to vector<8x512xf32>
    %23 = arith.mulf %20, %22 : vector<8x512xf32>
    %c8 = arith.constant 8 : index
    %c0_16 = arith.constant 0 : index
    %24 = vector.load %arg6[%c8, %c0_16] : memref<72x512xf32, #tpu.memory_space<vmem>>, vector<8x512xf32>
    tpu.vector_store %arg6[%c8, %c0_16], %23 {strides = array<i32>} : memref<72x512xf32, #tpu.memory_space<vmem>>, vector<8x512xf32>,
    %c15_i32 = arith.constant 15 : i32
    %25 = tpu.dynamic_rotate %14 by %c15_i32 dim 1 : vector<8x512xf32>, i32 -> vector<8x512xf32>
    %c2 = arith.constant 2 : index
    %c0_17 = arith.constant 0 : index
    %26 = vector.load %arg4[%c2, %c0_17] : memref<16x512xf32, #tpu.memory_space<vmem>>, vector<1x512xf32>
    %27 = vector.broadcast %26 : vector<1x512xf32> to vector<8x512xf32>
    %28 = arith.mulf %25, %27 : vector<8x512xf32>
    %c16 = arith.constant 16 : index
    %c0_18 = arith.constant 0 : index
    %29 = vector.load %arg6[%c16, %c0_18] : memref<72x512xf32, #tpu.memory_space<vmem>>, vector<8x512xf32>
    tpu.vector_store %arg6[%c16, %c0_18], %28 {strides = array<i32>} : memref<72x512xf32, #tpu.memory_space<vmem>>, vector<8x512xf32>,
    %c1_i32 = arith.constant 1 : i32
    %30 = tpu.dynamic_rotate %14 by %c1_i32 dim 1 : vector<8x512xf32>, i32 -> vector<8x512xf32>
    %c3 = arith.constant 3 : index
    %c0_19 = arith.constant 0 : index
    %31 = vector.load %arg4[%c3, %c0_19] : memref<16x512xf32, #tpu.memory_space<vmem>>, vector<1x512xf32>
    %32 = vector.broadcast %31 : vector<1x512xf32> to vector<8x512xf32>
    %33 = arith.mulf %30, %32 : vector<8x512xf32>
    %c24 = arith.constant 24 : index
    %c0_20 = arith.constant 0 : index
    %34 = vector.load %arg6[%c24, %c0_20] : memref<72x512xf32, #tpu.memory_space<vmem>>, vector<8x512xf32>
    tpu.vector_store %arg6[%c24, %c0_20], %33 {strides = array<i32>} : memref<72x512xf32, #tpu.memory_space<vmem>>, vector<8x512xf32>,
    %c32 = arith.constant 32 : index
    %c0_21 = arith.constant 0 : index
    %35 = vector.load %arg6[%c32, %c0_21] : memref<72x512xf32, #tpu.memory_space<vmem>>, vector<8x512xf32>
    tpu.vector_store %arg6[%c32, %c0_21], %14 {strides = array<i32>} : memref<72x512xf32, #tpu.memory_space<vmem>>, vector<8x512xf32>,
    %c511_i32 = arith.constant 511 : i32
    %36 = tpu.dynamic_rotate %14 by %c511_i32 dim 1 : vector<8x512xf32>, i32 -> vector<8x512xf32>
    %c5 = arith.constant 5 : index
    %c0_22 = arith.constant 0 : index
    %37 = vector.load %arg4[%c5, %c0_22] : memref<16x512xf32, #tpu.memory_space<vmem>>, vector<1x512xf32>
    %38 = vector.broadcast %37 : vector<1x512xf32> to vector<8x512xf32>
    %39 = arith.mulf %36, %38 : vector<8x512xf32>
    %c40 = arith.constant 40 : index
    %c0_23 = arith.constant 0 : index
    %40 = vector.load %arg6[%c40, %c0_23] : memref<72x512xf32, #tpu.memory_space<vmem>>, vector<8x512xf32>
    tpu.vector_store %arg6[%c40, %c0_23], %39 {strides = array<i32>} : memref<72x512xf32, #tpu.memory_space<vmem>>, vector<8x512xf32>,
    %c497_i32 = arith.constant 497 : i32
    %41 = tpu.dynamic_rotate %14 by %c497_i32 dim 1 : vector<8x512xf32>, i32 -> vector<8x512xf32>
    %c6 = arith.constant 6 : index
    %c0_24 = arith.constant 0 : index
    %42 = vector.load %arg4[%c6, %c0_24] : memref<16x512xf32, #tpu.memory_space<vmem>>, vector<1x512xf32>
    %43 = vector.broadcast %42 : vector<1x512xf32> to vector<8x512xf32>
    %44 = arith.mulf %41, %43 : vector<8x512xf32>
    %c48 = arith.constant 48 : index
    %c0_25 = arith.constant 0 : index
    %45 = vector.load %arg6[%c48, %c0_25] : memref<72x512xf32, #tpu.memory_space<vmem>>, vector<8x512xf32>
    tpu.vector_store %arg6[%c48, %c0_25], %44 {strides = array<i32>} : memref<72x512xf32, #tpu.memory_space<vmem>>, vector<8x512xf32>,
    %c496_i32 = arith.constant 496 : i32
    %46 = tpu.dynamic_rotate %14 by %c496_i32 dim 1 : vector<8x512xf32>, i32 -> vector<8x512xf32>
    %c7 = arith.constant 7 : index
    %c0_26 = arith.constant 0 : index
    %47 = vector.load %arg4[%c7, %c0_26] : memref<16x512xf32, #tpu.memory_space<vmem>>, vector<1x512xf32>
    %48 = vector.broadcast %47 : vector<1x512xf32> to vector<8x512xf32>
    %49 = arith.mulf %46, %48 : vector<8x512xf32>
    %c56 = arith.constant 56 : index
    %c0_27 = arith.constant 0 : index
    %50 = vector.load %arg6[%c56, %c0_27] : memref<72x512xf32, #tpu.memory_space<vmem>>, vector<8x512xf32>
    tpu.vector_store %arg6[%c56, %c0_27], %49 {strides = array<i32>} : memref<72x512xf32, #tpu.memory_space<vmem>>, vector<8x512xf32>,
    %c495_i32 = arith.constant 495 : i32
    %51 = tpu.dynamic_rotate %14 by %c495_i32 dim 1 : vector<8x512xf32>, i32 -> vector<8x512xf32>
    %c8_28 = arith.constant 8 : index
    %c0_29 = arith.constant 0 : index
    %52 = vector.load %arg4[%c8_28, %c0_29] : memref<16x512xf32, #tpu.memory_space<vmem>>, vector<1x512xf32>
    %53 = vector.broadcast %52 : vector<1x512xf32> to vector<8x512xf32>
    %54 = arith.mulf %51, %53 : vector<8x512xf32>
    %c64 = arith.constant 64 : index
    %c0_30 = arith.constant 0 : index
    %55 = vector.load %arg6[%c64, %c0_30] : memref<72x512xf32, #tpu.memory_space<vmem>>, vector<8x512xf32>
    tpu.vector_store %arg6[%c64, %c0_30], %54 {strides = array<i32>} : memref<72x512xf32, #tpu.memory_space<vmem>>, vector<8x512xf32>,
    %c0_31 = arith.constant 0 : index
    %c0_32 = arith.constant 0 : index
    %56 = vector.load %arg3[%c0_31, %c0_32] : memref<12x72xf32, #tpu.memory_space<vmem>>, vector<12x72xf32>
    %c0_33 = arith.constant 0 : index
    %c0_34 = arith.constant 0 : index
    %57 = vector.load %arg6[%c0_33, %c0_34] : memref<72x512xf32, #tpu.memory_space<vmem>>, vector<72x512xf32>
    %cst_35 = arith.constant dense<0.000000e+00> : vector<12x512xf32>
    %58 = tpu.matmul %56, %57, %cst_35 {dimension_numbers = #tpu.dot_dimension_numbers<[1], [0], [0], [1], [0, 0, 1, 1], [], []>} : vector<12x72xf32>, vector<72x512xf32>, vector<12x512xf32> -> vector<12x512xf32>
    %59 = vector.extract_strided_slice %1 {offsets = [0, 0], sizes = [4, 256], strides = [1, 1]} : vector<8x256xf32> to vector<4x256xf32>
    %60 = vector.extract_strided_slice %58 {offsets = [0, 0], sizes = [12, 256], strides = [1, 1]} : vector<12x512xf32> to vector<12x256xf32>
    %61 = tpu.concatenate %59, %60 in 0 : vector<4x256xf32>, vector<12x256xf32> -> vector<16x256xf32>
    %c0_36 = arith.constant 0 : index
    %c0_37 = arith.constant 0 : index
    %c0_38 = arith.constant 0 : index
    %62 = vector.load %arg5[%c0_36, %c0_37, %c0_38] : memref<2x16x256xf32, #tpu.memory_space<vmem>>, vector<1x16x256xf32>
    %63 = vector.shape_cast %62 : vector<1x16x256xf32> to vector<16x256xf32>
    %64 = vector.shape_cast %61 : vector<16x256xf32> to vector<1x16x256xf32>
    tpu.vector_store %arg5[%c0_36, %c0_37, %c0_38], %64 {strides = array<i32>} : memref<2x16x256xf32, #tpu.memory_space<vmem>>, vector<1x16x256xf32>,
    %65 = vector.extract_strided_slice %3 {offsets = [0, 0], sizes = [4, 256], strides = [1, 1]} : vector<8x256xf32> to vector<4x256xf32>
    %66 = vector.extract_strided_slice %58 {offsets = [0, 256], sizes = [12, 256], strides = [1, 1]} : vector<12x512xf32> to vector<12x256xf32>
    %67 = tpu.concatenate %65, %66 in 0 : vector<4x256xf32>, vector<12x256xf32> -> vector<16x256xf32>
    %c1_39 = arith.constant 1 : index
    %c0_40 = arith.constant 0 : index
    %c0_41 = arith.constant 0 : index
    %68 = vector.load %arg5[%c1_39, %c0_40, %c0_41] : memref<2x16x256xf32, #tpu.memory_space<vmem>>, vector<1x16x256xf32>
    %69 = vector.shape_cast %68 : vector<1x16x256xf32> to vector<16x256xf32>
    %70 = vector.shape_cast %67 : vector<16x256xf32> to vector<1x16x256xf32>
    tpu.vector_store %arg5[%c1_39, %c0_40, %c0_41], %70 {strides = array<i32>} : memref<2x16x256xf32, #tpu.memory_space<vmem>>, vector<1x16x256xf32>,
    return
  }
  func.func @transform_0(%arg0: i32) -> (i32, i32, i32) {
    %c0_i32 = arith.constant 0 : i32
    %c0_i32_0 = arith.constant 0 : i32
    %c0_i32_1 = arith.constant 0 : i32
    %c0_i32_2 = arith.constant 0 : i32
    return %c0_i32, %c0_i32_0, %c0_i32_1 : i32, i32, i32
  }
  func.func @transform_1(%arg0: i32) -> (i32, i32, i32) {
    %c0_i32 = arith.constant 0 : i32
    %c0_i32_0 = arith.constant 0 : i32
    %c0_i32_1 = arith.constant 0 : i32
    %c0_i32_2 = arith.constant 0 : i32
    return %c0_i32, %c0_i32_0, %c0_i32_1 : i32, i32, i32
  }
  func.func @transform_2(%arg0: i32) -> (i32, i32) {
    %c0_i32 = arith.constant 0 : i32
    %c0_i32_0 = arith.constant 0 : i32
    %c0_i32_1 = arith.constant 0 : i32
    return %c0_i32, %c0_i32_0 : i32, i32
  }
  func.func @transform_3(%arg0: i32) -> (i32, i32) {
    %c0_i32 = arith.constant 0 : i32
    %c0_i32_0 = arith.constant 0 : i32
    %c0_i32_1 = arith.constant 0 : i32
    return %c0_i32, %c0_i32_0 : i32, i32
  }
  func.func @transform_4(%arg0: i32) -> (i32, i32, i32) {
    %c0_i32 = arith.constant 0 : i32
    %c0_i32_0 = arith.constant 0 : i32
    %c0_i32_1 = arith.constant 0 : i32
    %c0_i32_2 = arith.constant 0 : i32
    return %c0_i32, %c0_i32_0, %c0_i32_1 : i32, i32, i32
  }
}

</mosaic_0001>

<llo_original>
// kernel: tpu_custom_call.1
$region0: #{tpu_custom_call.1}
  #allocation0 [shape = 'u32[]', space=smem, size = 0x4, offset = 0x4, fixed_abs, tag = 'smem constant byte address 0x4 - core index']
  #allocation1 [shape = 'u32[144,128]{1,0:T(1,128)}', space=vmem, size = 0x12000, scoped, tag = 'internal scratch']
  #allocation2 [shape = 'f32[72,512]{1,0:T(8,128)}', space=vmem, size = 0x24000, scoped, tag = 'scratch operand']
  %s0 = inlined_call_operand.hbm [shape: f32[2,8,256], index: 0, kind: input, shape index: {}]
  %s1 = inlined_call_operand.vmem [shape: f32[2,8,1], index: 1, kind: input, shape index: {}]
  %s2 = inlined_call_operand.vmem [shape: f32[12,72], index: 2, kind: input, shape index: {}]
  %s3 = inlined_call_operand.hbm [shape: f32[16,512], index: 3, kind: input, shape index: {}]
  %s4 = inlined_call_operand.hbm [shape: f32[2,16,256], index: 4, kind: output, shape index: {}]
  %s5 = sld [smem:[#allocation0]]
  $region34: #{tpu_custom_call.1} parent=0
    _
  %s7 = ssub.s32 1, %s5
  %s8 = scalar_select 0, %s7, %s5
  $region1: #{tpu_custom_call.1} parent=0
    #allocation3 [shape = 'u8[16384]{0}', space=vmem, size = 0x4000, scoped, tag = 'input window, operand 0, single buffered']
    #allocation4 [shape = 's32[1]{0}', space=sflag, size = 0x4, scoped, tag = 'scoped memory for tpu_custom_call.1']
    #allocation5 [shape = 's32[1]{0}', space=sflag, size = 0x4, scoped, tag = 'scoped memory for tpu_custom_call.1']
    #allocation6 [shape = 'u8[32768]{0}', space=vmem, size = 0x8000, scoped, tag = 'input window, operand 3, single buffered']
    #allocation7 [shape = 's32[1]{0}', space=sflag, size = 0x4, scoped, tag = 'scoped memory for tpu_custom_call.1']
    #allocation8 [shape = 'u8[32768]{0}', space=vmem, size = 0x8000, scoped, tag = 'output window, operand 0, single buffered']
    %9 = vsyncpa [#allocation4], 0
    %10 = vsyncpa [#allocation7], 0
    %11 = vsyncpa [#allocation5], 0
    // Predicated region
    $region2: #{tpu_custom_call.1} parent=1 // pred_check
      _
    $region3: #{tpu_custom_call.1} parent=1 // pred_check_branch
      %13 = sbr.rel (0) target = $region5
    $region4: #{tpu_custom_call.1} parent=1 // pred_region
      %s15 = ssub.s32 512, 512
      %16 = vsyncadd [#allocation4], %s15
      %s17 = sshll.u32 [#allocation3], 4
      %s18 = int_to_ptr.vmem [resolvable:$true] %s17
      %23 = dma.hbm_to_vmem [thread:$0]  %s0, 512, %s18, [#allocation4], 256, 256, 16
    $region5: #{tpu_custom_call.1} parent=1 // pred_fallthru
      _
    // Predicated region
    $region6: #{tpu_custom_call.1} parent=1 // pred_check
      _
    $region7: #{tpu_custom_call.1} parent=1 // pred_check_branch
      %25 = sbr.rel (0) target = $region9
    $region8: #{tpu_custom_call.1} parent=1 // pred_region
      _
    $region9: #{tpu_custom_call.1} parent=1 // pred_fallthru
      _
    // Predicated region
    $region10: #{tpu_custom_call.1} parent=1 // pred_check
      _
    $region11: #{tpu_custom_call.1} parent=1 // pred_check_branch
      %27 = sbr.rel (0) target = $region13
    $region12: #{tpu_custom_call.1} parent=1 // pred_region
      _
    $region13: #{tpu_custom_call.1} parent=1 // pred_fallthru
      _
    // Predicated region
    $region14: #{tpu_custom_call.1} parent=1 // pred_check
      _
    $region15: #{tpu_custom_call.1} parent=1 // pred_check_branch
      %29 = sbr.rel (0) target = $region17
    $region16: #{tpu_custom_call.1} parent=1 // pred_region
      %s31 = ssub.s32 1024, 1024
      %32 = vsyncadd [#allocation7], %s31
      %s33 = sshll.u32 [#allocation6], 4
      %s34 = int_to_ptr.vmem [resolvable:$true] %s33
      %39 = dma.hbm_to_vmem [thread:$0]  %s3, 1024, %s34, [#allocation7], 512, 512, 32
    $region17: #{tpu_custom_call.1} parent=1 // pred_fallthru
      _
    // Predicated region
    $region18: #{tpu_custom_call.1} parent=1 // pred_check
      _
    $region19: #{tpu_custom_call.1} parent=1 // pred_check_branch
      %41 = sbr.rel (0) target = $region21
    $region20: #{tpu_custom_call.1} parent=1 // pred_region
      %42 = dma.done [#allocation4], 512
    $region21: #{tpu_custom_call.1} parent=1 // pred_fallthru
      _
    // Predicated region
    $region22: #{tpu_custom_call.1} parent=1 // pred_check
      _
    $region23: #{tpu_custom_call.1} parent=1 // pred_check_branch
      %44 = sbr.rel (0) target = $region25
    $region24: #{tpu_custom_call.1} parent=1 // pred_region
      %45 = dma.done [#allocation7], 1024
    $region25: #{tpu_custom_call.1} parent=1 // pred_fallthru
      _
    %v46 = vld [vmem:[#allocation3] sm:$0xff]
    %v47 = vld [vmem:[#allocation3 + $0x8] sm:$0xff]
    %s48 = scalar_lea.vmem [#allocation3], 16
    %v49 = vld [vmem:[%s48] sm:$0xff]
    %v50 = vld [vmem:[%s48 + $0x8] sm:$0xff]
    %v51 = vld [vmem:[%s1] sm:$0xff]
    %53 = vset.pattern.permute.xlu0 0
    %54 = vperm.xlu0 %53, %v51
    %v55 = vpop.permute.xlu0 %54
    %v57 = vmul.f32 %v46, %v55
    %v58 = vmul.f32 %v47, %v55
    %v59 = vmul.f32 %v49, %v55
    %v60 = vmul.f32 %v50, %v55
    %s61 = scalar_lea.vmem %s1, 8
    %v62 = vld [vmem:[%s61] sm:$0xff]
    %64 = vset.pattern.permute.xlu0 0
    %65 = vperm.xlu0 %64, %v62
    %v66 = vpop.permute.xlu0 %65
    %v68 = vadd.f32 %v57, %v66
    %v69 = vadd.f32 %v58, %v66
    %v70 = vadd.f32 %v59, %v66
    %v71 = vadd.f32 %v60, %v66
    %v72 = vmax.f32 %v68, 0.0
    %v73 = vmax.f32 %v69, 0.0
    %v74 = vmax.f32 %v70, 0.0
    %v75 = vmax.f32 %v71, 0.0
    %76 = vrot.lane.b32.xlu0 %v72, 17
    %v77 = vpop.permute.xlu0 %76
    %78 = vrot.lane.b32.xlu0 %v73, 17
    %v79 = vpop.permute.xlu0 %78
    %80 = vrot.lane.b32.xlu0 %v74, 17
    %v81 = vpop.permute.xlu0 %80
    %82 = vrot.lane.b32.xlu0 %v75, 17
    %v83 = vpop.permute.xlu0 %82
    %v84 = vlaneseq
    %v85 = vand.u32 %v84, 127
    %vm86 = vcmp.lt.s32.totalorder %v85, 17
    %v87 = vsel %vm86, %v81, %v83
    %v88 = vsel %vm86, %v79, %v81
    %v89 = vsel %vm86, %v77, %v79
    %v90 = vsel %vm86, %v83, %v77
    %v91 = vld [vmem:[#allocation6] ss:$8 sm:$0xf]
    %v93 = vlaneseq
    %v94 = vshrl.u32 %v93, 7
    %v95 = vsub.s32 0, %v94
    %v96 = vrot.slane %v91, %v95
    %v97 = vlaneseq
    %v98 = vshrl.u32 %v97, 7
    %v99 = vsub.s32 1, %v98
    %v100 = vrot.slane %v91, %v99
    %v101 = vlaneseq
    %v102 = vshrl.u32 %v101, 7
    %v103 = vsub.s32 2, %v102
    %v104 = vrot.slane %v91, %v103
    %v105 = vlaneseq
    %v106 = vshrl.u32 %v105, 7
    %v107 = vsub.s32 3, %v106
    %v108 = vrot.slane %v91, %v107
    %v113 = vmul.f32 %v90, %v96
    %v114 = vmul.f32 %v89, %v100
    %v115 = vmul.f32 %v88, %v104
    %v116 = vmul.f32 %v87, %v108
    %117 = vst [vmem:[#allocation2] sm:$0xff] %v113
    %118 = vst [vmem:[#allocation2 + $0x8] sm:$0xff] %v114
    %119 = vst [vmem:[#allocation2 + $0x10] sm:$0xff] %v115
    %120 = vst [vmem:[#allocation2 + $0x18] sm:$0xff] %v116
    %121 = vrot.lane.b32.xlu0 %v72, 16
    %v122 = vpop.permute.xlu0 %121
    %123 = vrot.lane.b32.xlu0 %v73, 16
    %v124 = vpop.permute.xlu0 %123
    %125 = vrot.lane.b32.xlu0 %v74, 16
    %v126 = vpop.permute.xlu0 %125
    %127 = vrot.lane.b32.xlu0 %v75, 16
    %v128 = vpop.permute.xlu0 %127
    %vm129 = vcmp.lt.s32.totalorder %v85, 16
    %v130 = vsel %vm129, %v126, %v128
    %v131 = vsel %vm129, %v124, %v126
    %v132 = vsel %vm129, %v122, %v124
    %v133 = vsel %vm129, %v128, %v122
    %s134 = scalar_lea.vmem [#allocation6], 1
    %v135 = vld [vmem:[%s134] ss:$8 sm:$0xf]
    %v137 = vlaneseq
    %v138 = vshrl.u32 %v137, 7
    %v139 = vsub.s32 0, %v138
    %v140 = vrot.slane %v135, %v139
    %v141 = vlaneseq
    %v142 = vshrl.u32 %v141, 7
    %v143 = vsub.s32 1, %v142
    %v144 = vrot.slane %v135, %v143
    %v145 = vlaneseq
    %v146 = vshrl.u32 %v145, 7
    %v147 = vsub.s32 2, %v146
    %v148 = vrot.slane %v135, %v147
    %v149 = vlaneseq
    %v150 = vshrl.u32 %v149, 7
    %v151 = vsub.s32 3, %v150
    %v152 = vrot.slane %v135, %v151
    %v157 = vmul.f32 %v133, %v140
    %v158 = vmul.f32 %v132, %v144
    %v159 = vmul.f32 %v131, %v148
    %v160 = vmul.f32 %v130, %v152
    %161 = vst [vmem:[#allocation2 + $0x20] sm:$0xff] %v157
    %162 = vst [vmem:[#allocation2 + $0x28] sm:$0xff] %v158
    %163 = vst [vmem:[#allocation2 + $0x30] sm:$0xff] %v159
    %164 = vst [vmem:[#allocation2 + $0x38] sm:$0xff] %v160
    %165 = vrot.lane.b32.xlu0 %v72, 15
    %v166 = vpop.permute.xlu0 %165
    %167 = vrot.lane.b32.xlu0 %v73, 15
    %v168 = vpop.permute.xlu0 %167
    %169 = vrot.lane.b32.xlu0 %v74, 15
    %v170 = vpop.permute.xlu0 %169
    %171 = vrot.lane.b32.xlu0 %v75, 15
    %v172 = vpop.permute.xlu0 %171
    %vm173 = vcmp.lt.s32.totalorder %v85, 15
    %v174 = vsel %vm173, %v170, %v172
    %v175 = vsel %vm173, %v168, %v170
    %v176 = vsel %vm173, %v166, %v168
    %v177 = vsel %vm173, %v172, %v166
    %s178 = scalar_lea.vmem [#allocation6], 2
    %v179 = vld [vmem:[%s178] ss:$8 sm:$0xf]
    %v181 = vlaneseq
    %v182 = vshrl.u32 %v181, 7
    %v183 = vsub.s32 0, %v182
    %v184 = vrot.slane %v179, %v183
    %v185 = vlaneseq
    %v186 = vshrl.u32 %v185, 7
    %v187 = vsub.s32 1, %v186
    %v188 = vrot.slane %v179, %v187
    %v189 = vlaneseq
    %v190 = vshrl.u32 %v189, 7
    %v191 = vsub.s32 2, %v190
    %v192 = vrot.slane %v179, %v191
    %v193 = vlaneseq
    %v194 = vshrl.u32 %v193, 7
    %v195 = vsub.s32 3, %v194
    %v196 = vrot.slane %v179, %v195
    %v201 = vmul.f32 %v177, %v184
    %v202 = vmul.f32 %v176, %v188
    %v203 = vmul.f32 %v175, %v192
    %v204 = vmul.f32 %v174, %v196
    %205 = vst [vmem:[#allocation2 + $0x40] sm:$0xff] %v201
    %206 = vst [vmem:[#allocation2 + $0x48] sm:$0xff] %v202
    %207 = vst [vmem:[#allocation2 + $0x50] sm:$0xff] %v203
    %208 = vst [vmem:[#allocation2 + $0x58] sm:$0xff] %v204
    %209 = vrot.lane.b32.xlu0 %v72, 1
    %v210 = vpop.permute.xlu0 %209
    %211 = vrot.lane.b32.xlu0 %v73, 1
    %v212 = vpop.permute.xlu0 %211
    %213 = vrot.lane.b32.xlu0 %v74, 1
    %v214 = vpop.permute.xlu0 %213
    %215 = vrot.lane.b32.xlu0 %v75, 1
    %v216 = vpop.permute.xlu0 %215
    %vm217 = vcmp.lt.s32.totalorder %v85, 1
    %v218 = vsel %vm217, %v214, %v216
    %v219 = vsel %vm217, %v212, %v214
    %v220 = vsel %vm217, %v210, %v212
    %v221 = vsel %vm217, %v216, %v210
    %s222 = scalar_lea.vmem [#allocation6], 3
    %v223 = vld [vmem:[%s222] ss:$8 sm:$0xf]
    %v225 = vlaneseq
    %v226 = vshrl.u32 %v225, 7
    %v227 = vsub.s32 0, %v226
    %v228 = vrot.slane %v223, %v227
    %v229 = vlaneseq
    %v230 = vshrl.u32 %v229, 7
    %v231 = vsub.s32 1, %v230
    %v232 = vrot.slane %v223, %v231
    %v233 = vlaneseq
    %v234 = vshrl.u32 %v233, 7
    %v235 = vsub.s32 2, %v234
    %v236 = vrot.slane %v223, %v235
    %v237 = vlaneseq
    %v238 = vshrl.u32 %v237, 7
    %v239 = vsub.s32 3, %v238
    %v240 = vrot.slane %v223, %v239
    %v245 = vmul.f32 %v221, %v228
    %v246 = vmul.f32 %v220, %v232
    %v247 = vmul.f32 %v219, %v236
    %v248 = vmul.f32 %v218, %v240
    %249 = vst [vmem:[#allocation2 + $0x60] sm:$0xff] %v245
    %250 = vst [vmem:[#allocation2 + $0x68] sm:$0xff] %v246
    %251 = vst [vmem:[#allocation2 + $0x70] sm:$0xff] %v247
    %252 = vst [vmem:[#allocation2 + $0x78] sm:$0xff] %v248
    %253 = vst [vmem:[#allocation2 + $0x80] sm:$0xff] %v72
    %254 = vst [vmem:[#allocation2 + $0x88] sm:$0xff] %v73
    %255 = vst [vmem:[#allocation2 + $0x90] sm:$0xff] %v74
    %256 = vst [vmem:[#allocation2 + $0x98] sm:$0xff] %v75
    %257 = vrot.lane.b32.xlu0 %v72, 127
    %v258 = vpop.permute.xlu0 %257
    %259 = vrot.lane.b32.xlu0 %v73, 127
    %v260 = vpop.permute.xlu0 %259
    %261 = vrot.lane.b32.xlu0 %v74, 127
    %v262 = vpop.permute.xlu0 %261
    %263 = vrot.lane.b32.xlu0 %v75, 127
    %v264 = vpop.permute.xlu0 %263
    %vm265 = vcmp.lt.s32.totalorder %v85, 127
    %v266 = vsel %vm265, %v262, %v264
    %v267 = vsel %vm265, %v260, %v262
    %v268 = vsel %vm265, %v258, %v260
    %v269 = vsel %vm265, %v264, %v258
    %s270 = scalar_lea.vmem [#allocation6], 5
    %v271 = vld [vmem:[%s270] ss:$8 sm:$0xf]
    %v273 = vlaneseq
    %v274 = vshrl.u32 %v273, 7
    %v275 = vsub.s32 0, %v274
    %v276 = vrot.slane %v271, %v275
    %v277 = vlaneseq
    %v278 = vshrl.u32 %v277, 7
    %v279 = vsub.s32 1, %v278
    %v280 = vrot.slane %v271, %v279
    %v281 = vlaneseq
    %v282 = vshrl.u32 %v281, 7
    %v283 = vsub.s32 2, %v282
    %v284 = vrot.slane %v271, %v283
    %v285 = vlaneseq
    %v286 = vshrl.u32 %v285, 7
    %v287 = vsub.s32 3, %v286
    %v288 = vrot.slane %v271, %v287
    %v293 = vmul.f32 %v268, %v276
    %v294 = vmul.f32 %v267, %v280
    %v295 = vmul.f32 %v266, %v284
    %v296 = vmul.f32 %v269, %v288
    %297 = vst [vmem:[#allocation2 + $0xa0] sm:$0xff] %v293
    %298 = vst [vmem:[#allocation2 + $0xa8] sm:$0xff] %v294
    %299 = vst [vmem:[#allocation2 + $0xb0] sm:$0xff] %v295
    %300 = vst [vmem:[#allocation2 + $0xb8] sm:$0xff] %v296
    %301 = vrot.lane.b32.xlu0 %v72, 113
    %v302 = vpop.permute.xlu0 %301
    %303 = vrot.lane.b32.xlu0 %v73, 113
    %v304 = vpop.permute.xlu0 %303
    %305 = vrot.lane.b32.xlu0 %v74, 113
    %v306 = vpop.permute.xlu0 %305
    %307 = vrot.lane.b32.xlu0 %v75, 113
    %v308 = vpop.permute.xlu0 %307
    %vm309 = vcmp.lt.s32.totalorder %v85, 113
    %v310 = vsel %vm309, %v306, %v308
    %v311 = vsel %vm309, %v304, %v306
    %v312 = vsel %vm309, %v302, %v304
    %v313 = vsel %vm309, %v308, %v302
    %s314 = scalar_lea.vmem [#allocation6], 6
    %v315 = vld [vmem:[%s314] ss:$8 sm:$0xf]
    %v317 = vlaneseq
    %v318 = vshrl.u32 %v317, 7
    %v319 = vsub.s32 0, %v318
    %v320 = vrot.slane %v315, %v319
    %v321 = vlaneseq
    %v322 = vshrl.u32 %v321, 7
    %v323 = vsub.s32 1, %v322
    %v324 = vrot.slane %v315, %v323
    %v325 = vlaneseq
    %v326 = vshrl.u32 %v325, 7
    %v327 = vsub.s32 2, %v326
    %v328 = vrot.slane %v315, %v327
    %v329 = vlaneseq
    %v330 = vshrl.u32 %v329, 7
    %v331 = vsub.s32 3, %v330
    %v332 = vrot.slane %v315, %v331
    %v337 = vmul.f32 %v312, %v320
    %v338 = vmul.f32 %v311, %v324
    %v339 = vmul.f32 %v310, %v328
    %v340 = vmul.f32 %v313, %v332
    %341 = vst [vmem:[#allocation2 + $0xc0] sm:$0xff] %v337
    %342 = vst [vmem:[#allocation2 + $0xc8] sm:$0xff] %v338
    %343 = vst [vmem:[#allocation2 + $0xd0] sm:$0xff] %v339
    %344 = vst [vmem:[#allocation2 + $0xd8] sm:$0xff] %v340
    %345 = vrot.lane.b32.xlu0 %v72, 112
    %v346 = vpop.permute.xlu0 %345
    %347 = vrot.lane.b32.xlu0 %v73, 112
    %v348 = vpop.permute.xlu0 %347
    %349 = vrot.lane.b32.xlu0 %v74, 112
    %v350 = vpop.permute.xlu0 %349
    %351 = vrot.lane.b32.xlu0 %v75, 112
    %v352 = vpop.permute.xlu0 %351
    %vm353 = vcmp.lt.s32.totalorder %v85, 112
    %v354 = vsel %vm353, %v350, %v352
    %v355 = vsel %vm353, %v348, %v350
    %v356 = vsel %vm353, %v346, %v348
    %v357 = vsel %vm353, %v352, %v346
    %s358 = scalar_lea.vmem [#allocation6], 7
    %v359 = vld [vmem:[%s358] ss:$8 sm:$0xf]
    %v361 = vlaneseq
    %v362 = vshrl.u32 %v361, 7
    %v363 = vsub.s32 0, %v362
    %v364 = vrot.slane %v359, %v363
    %v365 = vlaneseq
    %v366 = vshrl.u32 %v365, 7
    %v367 = vsub.s32 1, %v366
    %v368 = vrot.slane %v359, %v367
    %v369 = vlaneseq
    %v370 = vshrl.u32 %v369, 7
    %v371 = vsub.s32 2, %v370
    %v372 = vrot.slane %v359, %v371
    %v373 = vlaneseq
    %v374 = vshrl.u32 %v373, 7
    %v375 = vsub.s32 3, %v374
    %v376 = vrot.slane %v359, %v375
    %v381 = vmul.f32 %v356, %v364
    %v382 = vmul.f32 %v355, %v368
    %v383 = vmul.f32 %v354, %v372
    %v384 = vmul.f32 %v357, %v376
    %385 = vst [vmem:[#allocation2 + $0xe0] sm:$0xff] %v381
    %386 = vst [vmem:[#allocation2 + $0xe8] sm:$0xff] %v382
    %387 = vst [vmem:[#allocation2 + $0xf0] sm:$0xff] %v383
    %388 = vst [vmem:[#allocation2 + $0xf8] sm:$0xff] %v384
    %389 = vrot.lane.b32.xlu0 %v72, 111
    %v390 = vpop.permute.xlu0 %389
    %391 = vrot.lane.b32.xlu0 %v73, 111
    %v392 = vpop.permute.xlu0 %391
    %393 = vrot.lane.b32.xlu0 %v74, 111
    %v394 = vpop.permute.xlu0 %393
    %395 = vrot.lane.b32.xlu0 %v75, 111
    %v396 = vpop.permute.xlu0 %395
    %vm397 = vcmp.lt.s32.totalorder %v85, 111
    %v398 = vsel %vm397, %v394, %v396
    %v399 = vsel %vm397, %v392, %v394
    %v400 = vsel %vm397, %v390, %v392
    %v401 = vsel %vm397, %v396, %v390
    %s402 = scalar_lea.vmem [#allocation6], 32
    %v403 = vld [vmem:[%s402] ss:$8 sm:$0xf]
    %v405 = vlaneseq
    %v406 = vshrl.u32 %v405, 7
    %v407 = vsub.s32 0, %v406
    %v408 = vrot.slane %v403, %v407
    %v409 = vlaneseq
    %v410 = vshrl.u32 %v409, 7
    %v411 = vsub.s32 1, %v410
    %v412 = vrot.slane %v403, %v411
    %v413 = vlaneseq
    %v414 = vshrl.u32 %v413, 7
    %v415 = vsub.s32 2, %v414
    %v416 = vrot.slane %v403, %v415
    %v417 = vlaneseq
    %v418 = vshrl.u32 %v417, 7
    %v419 = vsub.s32 3, %v418
    %v420 = vrot.slane %v403, %v419
    %v425 = vmul.f32 %v400, %v408
    %v426 = vmul.f32 %v399, %v412
    %v427 = vmul.f32 %v398, %v416
    %v428 = vmul.f32 %v401, %v420
    %429 = vst [vmem:[#allocation2 + $0x100] sm:$0xff] %v425
    %430 = vst [vmem:[#allocation2 + $0x108] sm:$0xff] %v426
    %431 = vst [vmem:[#allocation2 + $0x110] sm:$0xff] %v427
    %432 = vst [vmem:[#allocation2 + $0x118] sm:$0xff] %v428
    %v433 = vld [vmem:[%s2] sm:$0xff]
    %v434 = vld [vmem:[%s2 + $0x8] sm:$0xf]
    %v435 = vld [vmem:[#allocation2] sm:$0xff]
    %v436 = vld [vmem:[#allocation2 + $0x8] sm:$0xff]
    %v437 = vld [vmem:[#allocation2 + $0x10] sm:$0xff]
    %v438 = vld [vmem:[#allocation2 + $0x18] sm:$0xff]
    %v439 = vld [vmem:[#allocation2 + $0x20] sm:$0xff]
    %v440 = vld [vmem:[#allocation2 + $0x28] sm:$0xff]
    %v441 = vld [vmem:[#allocation2 + $0x30] sm:$0xff]
    %v442 = vld [vmem:[#allocation2 + $0x38] sm:$0xff]
    %v443 = vld [vmem:[#allocation2 + $0x40] sm:$0xff]
    %v444 = vld [vmem:[#allocation2 + $0x48] sm:$0xff]
    %v445 = vld [vmem:[#allocation2 + $0x50] sm:$0xff]
    %v446 = vld [vmem:[#allocation2 + $0x58] sm:$0xff]
    %v447 = vld [vmem:[#allocation2 + $0x60] sm:$0xff]
    %v448 = vld [vmem:[#allocation2 + $0x68] sm:$0xff]
    %v449 = vld [vmem:[#allocation2 + $0x70] sm:$0xff]
    %v450 = vld [vmem:[#allocation2 + $0x78] sm:$0xff]
    %v451 = vld [vmem:[#allocation2 + $0x80] sm:$0xff]
    %v452 = vld [vmem:[#allocation2 + $0x88] sm:$0xff]
    %v453 = vld [vmem:[#allocation2 + $0x90] sm:$0xff]
    %v454 = vld [vmem:[#allocation2 + $0x98] sm:$0xff]
    %v455 = vld [vmem:[#allocation2 + $0xa0] sm:$0xff]
    %v456 = vld [vmem:[#allocation2 + $0xa8] sm:$0xff]
    %v457 = vld [vmem:[#allocation2 + $0xb0] sm:$0xff]
    %v458 = vld [vmem:[#allocation2 + $0xb8] sm:$0xff]
    %v459 = vld [vmem:[#allocation2 + $0xc0] sm:$0xff]
    %v460 = vld [vmem:[#allocation2 + $0xc8] sm:$0xff]
    %v461 = vld [vmem:[#allocation2 + $0xd0] sm:$0xff]
    %v462 = vld [vmem:[#allocation2 + $0xd8] sm:$0xff]
    %v463 = vld [vmem:[#allocation2 + $0xe0] sm:$0xff]
    %v464 = vld [vmem:[#allocation2 + $0xe8] sm:$0xff]
    %v465 = vld [vmem:[#allocation2 + $0xf0] sm:$0xff]
    %v466 = vld [vmem:[#allocation2 + $0xf8] sm:$0xff]
    %v467 = vld [vmem:[#allocation2 + $0x100] sm:$0xff]
    %v468 = vld [vmem:[#allocation2 + $0x108] sm:$0xff]
    %v469 = vld [vmem:[#allocation2 + $0x110] sm:$0xff]
    %v470 = vld [vmem:[#allocation2 + $0x118] sm:$0xff]
    %vm471 = vcmask 588800
    %v473 = vsel %vm471, %v433, 0
    %v476 = vsel %vm471, %v434, 0
    %478 = vmatprep.subr.mxu0 %v436
    %479 = vmatpush1.msra.mxu0 %v435
    %480 = vmatprep.subr.mxu0 %v440
    %481 = vmatpush1.msra.mxu0 %v439
    %482 = vmatprep.subr.mxu0 %v444
    %483 = vmatpush1.msra.mxu0 %v443
    %484 = vmatprep.subr.mxu0 %v448
    %485 = vmatpush1.msra.mxu0 %v447
    %486 = vmatprep.subr.mxu0 %v452
    %487 = vmatpush1.msra.mxu0 %v451
    %488 = vmatprep.subr.mxu0 %v456
    %489 = vmatpush1.msra.mxu0 %v455
    %490 = vmatprep.subr.mxu0 %v460
    %491 = vmatpush1.msra.mxu0 %v459
    %492 = vmatprep.subr.mxu0 %v464
    %493 = vmatpush1.msra.mxu0 %v463
    %494 = vmatprep.subr.mxu0 %v468
    %495 = vmatpush1.msra.mxu0 %v467
    %496 = vmatprep.subr.mxu0 0.0
    %497 = vmatpush1.msra.mxu0 0.0
    %498 = vmatprep.subr.mxu0 0.0
    %499 = vmatpush1.msra.mxu0 0.0
    %500 = vmatprep.subr.mxu0 0.0
    %501 = vmatpush1.msra.mxu0 0.0
    %502 = vmatprep.subr.mxu0 0.0
    %503 = vmatpush1.msra.mxu0 0.0
    %504 = vmatprep.subr.mxu0 0.0
    %505 = vmatpush1.msra.mxu0 0.0
    %506 = vmatprep.subr.mxu0 0.0
    %507 = vmatpush1.msra.mxu0 0.0
    %508 = vmatprep.subr.mxu0 0.0
    %509 = vmatpush1.msra.mxu0 0.0
    %510 = vmatprep.subr.mxu0 0.0
    %511 = vmatpush1.msra.mxu0 0.0
    %512 = vmatprep.subr.mxu0 0.0
    %513 = vmatpush1.msra.mxu0 0.0
    %514 = vmatprep.subr.mxu0 0.0
    %515 = vmatpush1.msra.mxu0 0.0
    %516 = vmatprep.subr.mxu0 0.0
    %517 = vmatpush1.msra.mxu0 0.0
    %518 = vmatprep.subr.mxu0 0.0
    %519 = vmatpush1.msra.mxu0 0.0
    %520 = vmatprep.subr.mxu0 0.0
    %521 = vmatpush1.msra.mxu0 0.0
    %522 = vmatprep.subr.mxu0 0.0
    %523 = vmatpush1.msra.mxu0 0.0
    %524 = vmatprep.subr.mxu0 0.0
    %525 = vmatpush1.msra.mxu0 0.0
    %526 = vmatprep.subr.mxu0 0.0
    %527 = vmatpush1.msra.mxu0 0.0
    %528 = vmatprep.subr.mxu0 0.0
    %529 = vmatpush1.msra.mxu0 0.0
    %530 = vmatprep.subr.mxu0 0.0
    %531 = vmatpush1.msra.mxu0 0.0
    %532 = vmatprep.subr.mxu0 0.0
    %533 = vmatpush1.msra.mxu0 0.0
    %534 = vmatprep.subr.mxu0 0.0
    %535 = vmatpush1.msra.mxu0 0.0
    %536 = vmatprep.subr.mxu0 0.0
    %537 = vmatpush1.msra.mxu0 0.0
    %538 = vmatprep.subr.mxu0 0.0
    %539 = vmatpush1.msra.mxu0 0.0
    %540 = vmatprep.subr.mxu0 0.0
    %541 = vmatpush1.msra.mxu0 0.0
    %542 = vmatprep.mubr.f32.mxu0 0.0
    %543 = vmatmul.mubr.f32.gmra.mrb[0].mxu0 %v473
    %v544 = vpop.f32.mrb[0].mxu0
    %v545 = vadd.f32 0.0, %v544
    %v546 = vpop.f32.mrb[0].mxu0
    %v547 = vadd.f32 0.0, %v546
    %548 = vmatprep.mubr.f32.mxu0 0.0
    %549 = vmatmul.mubr.f32.gmra.mrb[0].mxu0 %v476
    %v550 = vpop.f32.mrb[0].mxu0
    %v551 = vadd.f32 0.0, %v550
    %v552 = vpop.f32.mrb[0].mxu0
    %v553 = vadd.f32 0.0, %v552
    %554 = vdwg.mxu0
    %555 = vmatprep.subr.mxu0 %v438
    %556 = vmatpush1.msra.mxu0 %v437
    %557 = vmatprep.subr.mxu0 %v442
    %558 = vmatpush1.msra.mxu0 %v441
    %559 = vmatprep.subr.mxu0 %v446
    %560 = vmatpush1.msra.mxu0 %v445
    %561 = vmatprep.subr.mxu0 %v450
    %562 = vmatpush1.msra.mxu0 %v449
    %563 = vmatprep.subr.mxu0 %v454
    %564 = vmatpush1.msra.mxu0 %v453
    %565 = vmatprep.subr.mxu0 %v458
    %566 = vmatpush1.msra.mxu0 %v457
    %567 = vmatprep.subr.mxu0 %v462
    %568 = vmatpush1.msra.mxu0 %v461
    %569 = vmatprep.subr.mxu0 %v466
    %570 = vmatpush1.msra.mxu0 %v465
    %571 = vmatprep.subr.mxu0 %v470
    %572 = vmatpush1.msra.mxu0 %v469
    %573 = vmatprep.subr.mxu0 0.0
    %574 = vmatpush1.msra.mxu0 0.0
    %575 = vmatprep.subr.mxu0 0.0
    %576 = vmatpush1.msra.mxu0 0.0
    %577 = vmatprep.subr.mxu0 0.0
    %578 = vmatpush1.msra.mxu0 0.0
    %579 = vmatprep.subr.mxu0 0.0
    %580 = vmatpush1.msra.mxu0 0.0
    %581 = vmatprep.subr.mxu0 0.0
    %582 = vmatpush1.msra.mxu0 0.0
    %583 = vmatprep.subr.mxu0 0.0
    %584 = vmatpush1.msra.mxu0 0.0
    %585 = vmatprep.subr.mxu0 0.0
    %586 = vmatpush1.msra.mxu0 0.0
    %587 = vmatprep.subr.mxu0 0.0
    %588 = vmatpush1.msra.mxu0 0.0
    %589 = vmatprep.subr.mxu0 0.0
    %590 = vmatpush1.msra.mxu0 0.0
    %591 = vmatprep.subr.mxu0 0.0
    %592 = vmatpush1.msra.mxu0 0.0
    %593 = vmatprep.subr.mxu0 0.0
    %594 = vmatpush1.msra.mxu0 0.0
    %595 = vmatprep.subr.mxu0 0.0
    %596 = vmatpush1.msra.mxu0 0.0
    %597 = vmatprep.subr.mxu0 0.0
    %598 = vmatpush1.msra.mxu0 0.0
    %599 = vmatprep.subr.mxu0 0.0
    %600 = vmatpush1.msra.mxu0 0.0
    %601 = vmatprep.subr.mxu0 0.0
    %602 = vmatpush1.msra.mxu0 0.0
    %603 = vmatprep.subr.mxu0 0.0
    %604 = vmatpush1.msra.mxu0 0.0
    %605 = vmatprep.subr.mxu0 0.0
    %606 = vmatpush1.msra.mxu0 0.0
    %607 = vmatprep.subr.mxu0 0.0
    %608 = vmatpush1.msra.mxu0 0.0
    %609 = vmatprep.subr.mxu0 0.0
    %610 = vmatpush1.msra.mxu0 0.0
    %611 = vmatprep.subr.mxu0 0.0
    %612 = vmatpush1.msra.mxu0 0.0
    %613 = vmatprep.subr.mxu0 0.0
    %614 = vmatpush1.msra.mxu0 0.0
    %615 = vmatprep.subr.mxu0 0.0
    %616 = vmatpush1.msra.mxu0 0.0
    %617 = vmatprep.subr.mxu0 0.0
    %618 = vmatpush1.msra.mxu0 0.0
    %619 = vmatprep.mubr.f32.mxu0 0.0
    %620 = vmatmul.mubr.f32.gmra.mrb[0].mxu0 %v473
    %v621 = vpop.f32.mrb[0].mxu0
    %v622 = vadd.f32 0.0, %v621
    %v623 = vpop.f32.mrb[0].mxu0
    %v624 = vadd.f32 0.0, %v623
    %625 = vmatprep.mubr.f32.mxu0 0.0
    %626 = vmatmul.mubr.f32.gmra.mrb[0].mxu0 %v476
    %v627 = vpop.f32.mrb[0].mxu0
    %v628 = vadd.f32 0.0, %v627
    %v629 = vpop.f32.mrb[0].mxu0
    %v630 = vadd.f32 0.0, %v629
    %631 = vdwg.mxu0
    %vm636 = vcmask 1043456
    %v637 = vrot.slane %v545, 4
    %v638 = vrot.slane %v547, 4
    %v639 = vrot.slane %v551, 4
    %v640 = vsel %vm636, %v637, %v639
    %v641 = vrot.slane %v553, 4
    %v642 = vsel %vm636, %v638, %v641
    %v647 = vsel %vm636, %v46, %v637
    %v648 = vsel %vm636, %v47, %v638
    %649 = vst [vmem:[#allocation8] sm:$0xff] %v647
    %650 = vst [vmem:[#allocation8 + $0x8] sm:$0xff] %v648
    %651 = vst [vmem:[#allocation8 + $0x10] sm:$0xff] %v640
    %652 = vst [vmem:[#allocation8 + $0x18] sm:$0xff] %v642
    %v657 = vrot.slane %v622, 4
    %v658 = vrot.slane %v624, 4
    %v659 = vrot.slane %v628, 4
    %v660 = vsel %vm636, %v657, %v659
    %v661 = vrot.slane %v630, 4
    %v662 = vsel %vm636, %v658, %v661
    %v667 = vsel %vm636, %v49, %v657
    %v668 = vsel %vm636, %v50, %v658
    %s669 = scalar_lea.vmem [#allocation8], 32
    %670 = vst [vmem:[%s669] sm:$0xff] %v667
    %671 = vst [vmem:[%s669 + $0x8] sm:$0xff] %v668
    %672 = vst [vmem:[%s669 + $0x10] sm:$0xff] %v660
    %673 = vst [vmem:[%s669 + $0x18] sm:$0xff] %v662
    // Predicated region
    $region26: #{tpu_custom_call.1} parent=1 // pred_check
      _
    $region27: #{tpu_custom_call.1} parent=1 // pred_check_branch
      %675 = sbr.rel (0) target = $region29
    $region28: #{tpu_custom_call.1} parent=1 // pred_region
      %s677 = ssub.s32 1024, 1024
      %678 = vsyncadd [#allocation5], %s677
      %s679 = sshll.u32 [#allocation8], 4
      %s680 = int_to_ptr.vmem [resolvable:$true] %s679
      %685 = dma.vmem_to_hbm [thread:$0]  %s680, 1024, %s4, [#allocation5], 256, 256, 16
    $region29: #{tpu_custom_call.1} parent=1 // pred_fallthru
      _
    // Predicated region
    $region30: #{tpu_custom_call.1} parent=1 // pred_check
      _
    $region31: #{tpu_custom_call.1} parent=1 // pred_check_branch
      %687 = sbr.rel (0) target = $region33
    $region32: #{tpu_custom_call.1} parent=1 // pred_region
      %688 = dma.done [#allocation5], 1024
    $region33: #{tpu_custom_call.1} parent=1 // pred_fallthru
      _
    %689 = vsyncpa [#allocation4], 1
    %690 = vsyncpa [#allocation7], 1
    %691 = vsyncpa [#allocation5], 1

</llo_original>
